<compile_context>
chip_gen: v7x
topology: tpu7x:2x2x1
jax: 0.10.0
libtpu: 0.0.40
codegen_flags: <defaults>
</compile_context>

<pallas_src>
import jax
import jax.numpy as jnp
from jax.experimental import pallas as pl
from jax.experimental.pallas import tpu as pltpu


def _combined_attention_kernel(x_ref, w_fused_ref, b_fused_ref, o_ref):
    x = x_ref[...].astype(jnp.float32)                         # (bt, N, C)
    _, n, _ = x.shape

    # ---------------- GaussianAttention (VPU/EUP elementwise, f32 reductions) ----------------
    mean = jnp.mean(x, axis=1, keepdims=True)                  # (bt, 1, C)
    centered = x - mean
    sq = centered * centered
    # torch.var default is unbiased (divides by N-1); N == 1 is undefined, as in torch.
    var = jnp.sum(sq, axis=1, keepdims=True) * (1.0 / (n - 1)) + 1e-6
    inv_den = pl.reciprocal(2.0 * var + 1e-6)                  # (bt, 1, C), exact
    w = jnp.exp(-sq * inv_den)                                 # in (0, 1]
    # Channel softmax; w is bounded so no max-subtraction needed (exp(w) <= e).
    e = jnp.exp(w)
    inv = pl.reciprocal(jnp.sum(e, axis=-1, keepdims=True))    # (bt, N, 1), exact
    g = jnp.sum((e * inv) * x, axis=1)                         # (bt, C)

    # ---------- MultiheadAttention, rank-1 collapsed + fused projection (see header) ----------
    out_row = jnp.dot(g, w_fused_ref[...],
                      preferred_element_type=jnp.float32) + b_fused_ref[...]   # (bt, C)
    o_ref[...] = out_row[:, None, :].astype(o_ref.dtype)       # (bt, 1, C)


def _tpu_block_config():
    """Generation-aware heuristics: (prefer a multi-step grid?, target x-block bytes)."""
    try:
        kind = jax.devices()[0].device_kind.lower()
    except Exception:
        kind = ""
    # Two TensorCores per chip (v4/v5p megacore, v7x): splitting the batch grid helps.
    two_tensorcores = any(tag in kind for tag in ("v4", "v5p", "7"))
    # v7x: only 64 MiB physical VMEM and ~5 f32 temporaries per x block -> cap blocks at
    # 2 MiB; v5e/v6e have 128 MiB so 4 MiB blocks push closer to the HBM roofline.
    target_bytes = (2 << 20) if "7" in kind else (4 << 20)
    return two_tensorcores, target_bytes


def _pick_block_b(B, N, C, itemsize=4):
    """Largest batch-block (divisor of B) whose x tile fits the target bytes; on
    two-TensorCore chips prefer a grid of >= 2 steps so both cores get work."""
    prefer_multi, target_bytes = _tpu_block_config()
    per_batch = N * C * itemsize
    fitting = [d for d in range(1, B + 1)
               if B % d == 0 and d * per_batch <= target_bytes]
    if not fitting:
        return 1
    if prefer_multi:
        multi = [d for d in fitting if B // d >= 2]
        if multi:
            return max(multi)
    return max(fitting)


def combined_attention(x, in_proj_weight, in_proj_bias, out_proj_weight, out_proj_bias,
                       *, num_heads, block_b=None):
    """CombinedAttention forward.

    x:               (B, N, C)
    in_proj_weight:  (3C, C)          nn.MultiheadAttention.in_proj_weight
    in_proj_bias:    (3C,) or (1, 3C)
    out_proj_weight: (C, C)
    out_proj_bias:   (C,)  or (1, C)
    """
    B, N, C = x.shape
    assert C % num_heads == 0, "embed_dim must be divisible by num_heads"

    # Trace-time weight fusion (free; constant-folds under jit).  Q/K projections provably
    # do not affect the output (see header), so only the fused Wv/Wout path is passed in.
    wv = in_proj_weight[2 * C:3 * C, :]                               # (C, C)
    bv = jnp.reshape(in_proj_bias, (3 * C,))[2 * C:3 * C]             # (C,)
    bo = jnp.reshape(out_proj_bias, (C,))                             # (C,)
    w_fused = wv.T @ out_proj_weight.T                                # (C, C)
    b_fused = (bv @ out_proj_weight.T + bo)[None, :]                  # (1, C)

    bt = block_b if block_b is not None else _pick_block_b(B, N, C, x.dtype.itemsize)
    assert B % bt == 0, "block_b must divide the batch size"
    grid = (B // bt,)

    g_out = pl.pallas_call(
        _combined_attention_kernel,
        out_shape=jax.ShapeDtypeStruct((B, 1, C), x.dtype),
        grid=grid,
        in_specs=[
            pl.BlockSpec((bt, N, C), lambda b: (b, 0, 0)),            # x: bt batches / step
            pl.BlockSpec((C, C), lambda b: (0, 0)),                   # fused Wv^T @ Wout^T
            pl.BlockSpec((1, C), lambda b: (0, 0)),                   # fused bias
        ],
        # Only (bt, 1, C) per step: output HBM traffic is N x smaller than the input.
        out_specs=pl.BlockSpec((bt, 1, C), lambda b: (b, 0, 0)),
        compiler_params=pltpu.CompilerParams(
            dimension_semantics=("parallel",),
            vmem_limit_bytes=48 * 1024 * 1024,   # safe on v5e/v6e (128 MiB) and v7x (64 MiB)
        ),
    )(x, w_fused, b_fused)

    # Sequence broadcast lives outside the kernel so XLA can fuse it into the consumer.
    return jnp.broadcast_to(g_out, (B, N, C))


def _reference(x, in_proj_weight, in_proj_bias, out_proj_weight, out_proj_bias, num_heads):
    """Pure-JAX reference running the FULL MHA math (no rank-1 shortcut, no fusion)."""
    B, N, C = x.shape
    d = C // num_heads
    b_in = jnp.reshape(in_proj_bias, (3 * C,))
    b_out = jnp.reshape(out_proj_bias, (C,))

    mean = jnp.mean(x, axis=1, keepdims=True)
    var = jnp.var(x, axis=1, keepdims=True, ddof=1) + 1e-6
    w = jnp.exp(-(x - mean) ** 2 / (2.0 * var + 1e-6))
    w = jax.nn.softmax(w, axis=-1)
    g = jnp.sum(w * x, axis=1)                              # (B, C)
    kv = jnp.broadcast_to(g[:, None, :], (B, N, C))

    wq, wk, wv = (in_proj_weight[0:C], in_proj_weight[C:2 * C], in_proj_weight[2 * C:3 * C])
    bq, bk, bv = b_in[0:C], b_in[C:2 * C], b_in[2 * C:3 * C]
    q = (x @ wq.T + bq).reshape(B, N, num_heads, d).transpose(0, 2, 1, 3) / (d ** 0.5)
    k = (kv @ wk.T + bk).reshape(B, N, num_heads, d).transpose(0, 2, 1, 3)
    v = (kv @ wv.T + bv).reshape(B, N, num_heads, d).transpose(0, 2, 1, 3)
    s = jnp.einsum('bhnd,bhmd->bhnm', q, k)
    a = jax.nn.softmax(s, axis=-1)
    o = jnp.einsum('bhnm,bhmd->bhnd', a, v)
    o = o.transpose(0, 2, 1, 3).reshape(B, N, C)
    return o @ out_proj_weight.T + b_out


if __name__ == "__main__":
    # Full-f32 matmuls everywhere (trace-time weight fusion, in-kernel dot, XLA reference)
    # so the 1e-4 comparison is not polluted by default bf16-pass matmuls.
    jax.config.update("jax_default_matmul_precision", "highest")

    B, N, C, H = 2, 8, 32, 4

    key = jax.random.PRNGKey(0)
    kx, k1, k2, k3, k4 = jax.random.split(key, 5)

    x = jax.random.normal(kx, (B, N, C), dtype=jnp.float32)
    # Synthetic nn.MultiheadAttention(embed_dim=C, num_heads=H) parameters.
    w_in = jax.random.normal(k1, (3 * C, C), dtype=jnp.float32) * (1.0 / (C ** 0.5))
    b_in = jax.random.normal(k2, (3 * C,), dtype=jnp.float32) * 0.01
    w_out = jax.random.normal(k3, (C, C), dtype=jnp.float32) * (1.0 / (C ** 0.5))
    b_out = jax.random.normal(k4, (C,), dtype=jnp.float32) * 0.01

    out = combined_attention(x, w_in, b_in, w_out, b_out, num_heads=H)
    out = jax.block_until_ready(out)

    ref = _reference(x, w_in, b_in, w_out, b_out, H)
    assert out.shape == (B, N, C)
    max_err = float(jnp.max(jnp.abs(out - ref)))
    assert jnp.allclose(out, ref, atol=1e-4, rtol=1e-4), f"mismatch vs reference: {max_err}"

    print("KERNEL_OK")
</pallas_src>

<mosaic_0001>
module attributes {stable_mosaic.version = 11 : i64} {
  func.func @_combined_attention_kernel(%arg0: i32, %arg1: memref<2x8x32xf32, #tpu.memory_space<vmem>>, %arg2: memref<32x32xf32, #tpu.memory_space<vmem>>, %arg3: memref<1x32xf32, #tpu.memory_space<vmem>>, %arg4: memref<2x1x32xf32, #tpu.memory_space<vmem>>) attributes {dimension_semantics = [#tpu.dimension_semantics<parallel>], iteration_bounds = array<i64: 1>, scalar_prefetch = 0 : i64, scratch_operands = 0 : i64, tpu.core_type = #tpu.core_type<tc>, window_params = [{transform_indices = @transform_0, window_bounds = array<i64: 2, 8, 32>}, {pipeline_mode = #tpu.pipeline_mode<synchronous>, transform_indices = @transform_1, window_bounds = array<i64: 32, 32>}, {pipeline_mode = #tpu.pipeline_mode<synchronous>, transform_indices = @transform_2, window_bounds = array<i64: 1, 32>}, {transform_indices = @transform_3, window_bounds = array<i64: 2, 1, 32>}]} {
    %c0 = arith.constant 0 : index
    %c0_0 = arith.constant 0 : index
    %c0_1 = arith.constant 0 : index
    %0 = vector.load %arg1[%c0, %c0_0, %c0_1] : memref<2x8x32xf32, #tpu.memory_space<vmem>>, vector<2x8x32xf32>
    %cst = arith.constant dense<0.000000e+00> : vector<2x32xf32>
    %1 = vector.multi_reduction <add>, %0, %cst [1] : vector<2x8x32xf32> to vector<2x32xf32>
    %2 = vector.shape_cast %1 : vector<2x32xf32> to vector<2x1x32xf32>
    %cst_2 = arith.constant 8.000000e+00 : f32
    %3 = vector.broadcast %cst_2 : f32 to vector<2x1x32xf32>
    %4 = arith.divf %2, %3 : vector<2x1x32xf32>
    %5 = vector.broadcast %4 : vector<2x1x32xf32> to vector<2x8x32xf32>
    %6 = arith.subf %0, %5 : vector<2x8x32xf32>
    %7 = arith.mulf %6, %6 : vector<2x8x32xf32>
    %cst_3 = arith.constant dense<0.000000e+00> : vector<2x32xf32>
    %8 = vector.multi_reduction <add>, %7, %cst_3 [1] : vector<2x8x32xf32> to vector<2x32xf32>
    %9 = vector.shape_cast %8 : vector<2x32xf32> to vector<2x1x32xf32>
    %cst_4 = arith.constant 0.142857149 : f32
    %10 = vector.broadcast %cst_4 : f32 to vector<2x1x32xf32>
    %11 = arith.mulf %9, %10 : vector<2x1x32xf32>
    %cst_5 = arith.constant 9.99999997E-7 : f32
    %12 = vector.broadcast %cst_5 : f32 to vector<2x1x32xf32>
    %13 = arith.addf %11, %12 : vector<2x1x32xf32>
    %cst_6 = arith.constant 2.000000e+00 : f32
    %14 = vector.broadcast %cst_6 : f32 to vector<2x1x32xf32>
    %15 = arith.mulf %14, %13 : vector<2x1x32xf32>
    %cst_7 = arith.constant 9.99999997E-7 : f32
    %16 = vector.broadcast %cst_7 : f32 to vector<2x1x32xf32>
    %17 = arith.addf %15, %16 : vector<2x1x32xf32>
    %18 = tpu.reciprocal %17 : vector<2x1x32xf32> -> vector<2x1x32xf32>
    %cst_8 = arith.constant 0.000000e+00 : f32
    %19 = vector.broadcast %cst_8 : f32 to vector<2x8x32xf32>
    %20 = arith.subf %19, %7 : vector<2x8x32xf32>
    %21 = vector.broadcast %18 : vector<2x1x32xf32> to vector<2x8x32xf32>
    %22 = arith.mulf %20, %21 : vector<2x8x32xf32>
    %23 = math.exp %22 : vector<2x8x32xf32>
    %24 = math.exp %23 : vector<2x8x32xf32>
    %cst_9 = arith.constant dense<0.000000e+00> : vector<2x8xf32>
    %25 = vector.multi_reduction <add>, %24, %cst_9 [2] : vector<2x8x32xf32> to vector<2x8xf32>
    %26 = vector.shape_cast %25 : vector<2x8xf32> to vector<2x8x1xf32>
    %27 = tpu.reciprocal %26 : vector<2x8x1xf32> -> vector<2x8x1xf32>
    %28 = vector.broadcast %27 : vector<2x8x1xf32> to vector<2x8x32xf32>
    %29 = arith.mulf %24, %28 : vector<2x8x32xf32>
    %30 = arith.mulf %29, %0 : vector<2x8x32xf32>
    %cst_10 = arith.constant dense<0.000000e+00> : vector<2x32xf32>
    %31 = vector.multi_reduction <add>, %30, %cst_10 [1] : vector<2x8x32xf32> to vector<2x32xf32>
    %c0_11 = arith.constant 0 : index
    %c0_12 = arith.constant 0 : index
    %32 = vector.load %arg2[%c0_11, %c0_12] : memref<32x32xf32, #tpu.memory_space<vmem>>, vector<32x32xf32>
    %cst_13 = arith.constant dense<0.000000e+00> : vector<2x32xf32>
    %33 = tpu.matmul %31, %32, %cst_13 {dimension_numbers = #tpu.dot_dimension_numbers<[1], [0], [0], [1], [0, 0, 1, 1], [], []>, precision = #tpu.contract_precision<fp32>} : vector<2x32xf32>, vector<32x32xf32>, vector<2x32xf32> -> vector<2x32xf32>
    %c0_14 = arith.constant 0 : index
    %c0_15 = arith.constant 0 : index
    %34 = vector.load %arg3[%c0_14, %c0_15] : memref<1x32xf32, #tpu.memory_space<vmem>>, vector<1x32xf32>
    %35 = vector.broadcast %34 : vector<1x32xf32> to vector<2x32xf32>
    %36 = arith.addf %33, %35 : vector<2x32xf32>
    %37 = vector.shape_cast %36 : vector<2x32xf32> to vector<2x1x32xf32>
    %c0_16 = arith.constant 0 : index
    %c0_17 = arith.constant 0 : index
    %c0_18 = arith.constant 0 : index
    %38 = vector.load %arg4[%c0_16, %c0_17, %c0_18] : memref<2x1x32xf32, #tpu.memory_space<vmem>>, vector<2x1x32xf32>
    tpu.vector_store %arg4[%c0_16, %c0_17, %c0_18], %37 {strides = array<i32>} : memref<2x1x32xf32, #tpu.memory_space<vmem>>, vector<2x1x32xf32>,
    return
  }
  func.func @transform_0(%arg0: i32) -> (i32, i32, i32) {
    %c0_i32 = arith.constant 0 : i32
    %c0_i32_0 = arith.constant 0 : i32
    %c0_i32_1 = arith.constant 0 : i32
    return %arg0, %c0_i32, %c0_i32_0 : i32, i32, i32
  }
  func.func @transform_1(%arg0: i32) -> (i32, i32) {
    %c0_i32 = arith.constant 0 : i32
    %c0_i32_0 = arith.constant 0 : i32
    %c0_i32_1 = arith.constant 0 : i32
    return %c0_i32, %c0_i32_0 : i32, i32
  }
  func.func @transform_2(%arg0: i32) -> (i32, i32) {
    %c0_i32 = arith.constant 0 : i32
    %c0_i32_0 = arith.constant 0 : i32
    %c0_i32_1 = arith.constant 0 : i32
    return %c0_i32, %c0_i32_0 : i32, i32
  }
  func.func @transform_3(%arg0: i32) -> (i32, i32, i32) {
    %c0_i32 = arith.constant 0 : i32
    %c0_i32_0 = arith.constant 0 : i32
    %c0_i32_1 = arith.constant 0 : i32
    return %arg0, %c0_i32, %c0_i32_0 : i32, i32, i32
  }
}

</mosaic_0001>

<llo_original>
// kernel: tpu_custom_call.1
$region0: #{tpu_custom_call.1}
  #allocation0 [shape = 'u32[]', space=smem, size = 0x4, offset = 0x4, fixed_abs, tag = 'smem constant byte address 0x4 - core index']
  #allocation1 [shape = 'u32[144,128]{1,0:T(1,128)}', space=vmem, size = 0x12000, scoped, tag = 'internal scratch']
  %s0 = inlined_call_operand.hbm [shape: f32[2,8,32], index: 0, kind: input, shape index: {}]
  %s1 = inlined_call_operand.hbm [shape: f32[32,32], index: 1, kind: input, shape index: {}]
  %s2 = inlined_call_operand.vmem [shape: f32[1,32], index: 2, kind: input, shape index: {}]
  %s3 = inlined_call_operand.hbm [shape: f32[2,1,32], index: 3, kind: output, shape index: {}]
  %s4 = sld [smem:[#allocation0]]
  $region30: #{tpu_custom_call.1} parent=0
    _
  %s6 = ssub.s32 1, %s4
  %s7 = scalar_select 0, %s6, %s4
  $region1: #{tpu_custom_call.1} parent=0
    #allocation2 [shape = 'u8[8192]{0}', space=vmem, size = 0x2000, scoped, tag = 'input window, operand 0, single buffered']
    #allocation3 [shape = 's32[1]{0}', space=sflag, size = 0x4, scoped, tag = 'scoped memory for tpu_custom_call.1']
    #allocation4 [shape = 's32[1]{0}', space=sflag, size = 0x4, scoped, tag = 'scoped memory for tpu_custom_call.1']
    #allocation5 [shape = 'u8[16384]{0}', space=vmem, size = 0x4000, scoped, tag = 'input window, operand 1, single buffered']
    #allocation6 [shape = 's32[1]{0}', space=sflag, size = 0x4, scoped, tag = 'scoped memory for tpu_custom_call.1']
    #allocation7 [shape = 'u8[1024]{0}', space=vmem, size = 0x400, scoped, tag = 'output window, operand 0, single buffered']
    %8 = vsyncpa [#allocation3], 0
    %9 = vsyncpa [#allocation6], 0
    %10 = vsyncpa [#allocation4], 0
    // Predicated region
    $region2: #{tpu_custom_call.1} parent=1 // pred_check
      _
    $region3: #{tpu_custom_call.1} parent=1 // pred_check_branch
      %12 = sbr.rel (0) target = $region5
    $region4: #{tpu_custom_call.1} parent=1 // pred_region
      %s14 = ssub.s32 256, 256
      %15 = vsyncadd [#allocation3], %s14
      %s16 = sshll.u32 [#allocation2], 4
      %s17 = int_to_ptr.vmem [resolvable:$true] %s16
      %22 = dma.hbm_to_vmem [thread:$0]  %s0, 256, %s17, [#allocation3], 128, 128, 8
    $region5: #{tpu_custom_call.1} parent=1 // pred_fallthru
      _
    // Predicated region
    $region6: #{tpu_custom_call.1} parent=1 // pred_check
      _
    $region7: #{tpu_custom_call.1} parent=1 // pred_check_branch
      %24 = sbr.rel (0) target = $region9
    $region8: #{tpu_custom_call.1} parent=1 // pred_region
      %s26 = ssub.s32 512, 512
      %27 = vsyncadd [#allocation6], %s26
      %s28 = sshll.u32 [#allocation5], 4
      %s29 = int_to_ptr.vmem [resolvable:$true] %s28
      %34 = dma.hbm_to_vmem [thread:$0]  %s1, 512, %s29, [#allocation6], 128, 128, 8
    $region9: #{tpu_custom_call.1} parent=1 // pred_fallthru
      _
    // Predicated region
    $region10: #{tpu_custom_call.1} parent=1 // pred_check
      _
    $region11: #{tpu_custom_call.1} parent=1 // pred_check_branch
      %36 = sbr.rel (0) target = $region13
    $region12: #{tpu_custom_call.1} parent=1 // pred_region
      _
    $region13: #{tpu_custom_call.1} parent=1 // pred_fallthru
      _
    // Predicated region
    $region14: #{tpu_custom_call.1} parent=1 // pred_check
      _
    $region15: #{tpu_custom_call.1} parent=1 // pred_check_branch
      %38 = sbr.rel (0) target = $region17
    $region16: #{tpu_custom_call.1} parent=1 // pred_region
      %39 = dma.done [#allocation3], 256
    $region17: #{tpu_custom_call.1} parent=1 // pred_fallthru
      _
    // Predicated region
    $region18: #{tpu_custom_call.1} parent=1 // pred_check
      _
    $region19: #{tpu_custom_call.1} parent=1 // pred_check_branch
      %41 = sbr.rel (0) target = $region21
    $region20: #{tpu_custom_call.1} parent=1 // pred_region
      %42 = dma.done [#allocation6], 512
    $region21: #{tpu_custom_call.1} parent=1 // pred_fallthru
      _
    %v43 = vld [vmem:[#allocation2] sm:$0xff]
    %v44 = vld [vmem:[#allocation2 + $0x8] sm:$0xff]
    %vm45 = vcmask 261120
    %v46 = vsel %vm45, %v43, 0.0
    %v47 = vrot.slane %v46, 4
    %v48 = vadd.f32 %v46, %v47
    %v49 = vrot.slane %v48, 2
    %v50 = vadd.f32 %v48, %v49
    %v51 = vrot.slane %v50, 1
    %v52 = vadd.f32 %v50, %v51
    %v53 = vsel %vm45, %v44, 0.0
    %v54 = vrot.slane %v53, 4
    %v55 = vadd.f32 %v53, %v54
    %v56 = vrot.slane %v55, 2
    %v57 = vadd.f32 %v55, %v56
    %v58 = vrot.slane %v57, 1
    %v59 = vadd.f32 %v57, %v58
    %v60 = vrcp.pop 8.0
    %v61 = vmul.f32 %v52, %v60
    %v62 = vmul.f32 %v59, %v60
    %v63 = vsub.f32 %v43, %v61
    %v64 = vsub.f32 %v44, %v62
    %v65 = vmul.f32 %v63, %v63
    %v66 = vmul.f32 %v64, %v64
    %v67 = vsel %vm45, %v65, 0.0
    %v68 = vrot.slane %v67, 4
    %v69 = vadd.f32 %v67, %v68
    %v70 = vrot.slane %v69, 2
    %v71 = vadd.f32 %v69, %v70
    %v72 = vrot.slane %v71, 1
    %v73 = vadd.f32 %v71, %v72
    %v74 = vsel %vm45, %v66, 0.0
    %v75 = vrot.slane %v74, 4
    %v76 = vadd.f32 %v74, %v75
    %v77 = vrot.slane %v76, 2
    %v78 = vadd.f32 %v76, %v77
    %v79 = vrot.slane %v78, 1
    %v80 = vadd.f32 %v78, %v79
    %v81 = vmul.f32 %v73, 0.14285715
    %v82 = vmul.f32 %v80, 0.14285715
    %v83 = vadd.f32 %v81, 1e-06
    %v84 = vadd.f32 %v82, 1e-06
    %v85 = vmul.f32 %v83, 2.0
    %v86 = vmul.f32 %v84, 2.0
    %v87 = vadd.f32 %v85, 1e-06
    %v88 = vadd.f32 %v86, 1e-06
    %v89 = vrcp.pop %v87
    %v90 = vrcp.pop %v88
    %v91 = vsub.f32 0.0, %v65
    %v92 = vsub.f32 0.0, %v66
    %v93 = vmul.f32 %v91, %v89
    %v94 = vmul.f32 %v92, %v90
    %v95 = vmul.f32 %v93, 1.442695
    %v96 = vpow.pop %v95
    %v97 = vmul.f32 %v94, 1.442695
    %v98 = vpow.pop %v97
    %v99 = vmul.f32 %v96, 1.442695
    %v100 = vpow.pop %v99
    %v101 = vmul.f32 %v98, 1.442695
    %v102 = vpow.pop %v101
    %v103 = vsel %vm45, %v100, 0.0
    %104 = vadd.xlane.f32.xlu0 %v103
    %v105 = vpop.xlane.xlu0 %104
    %v106 = vsel %vm45, %v102, 0.0
    %107 = vadd.xlane.f32.xlu0 %v106
    %v108 = vpop.xlane.xlu0 %107
    %v109 = vrcp.pop %v105
    %v110 = vrcp.pop %v108
    %v111 = vmul.f32 %v100, %v109
    %v112 = vmul.f32 %v102, %v110
    %v113 = vmul.f32 %v111, %v43
    %v114 = vmul.f32 %v112, %v44
    %v115 = vsel %vm45, %v113, 0.0
    %v116 = vrot.slane %v115, 4
    %v117 = vadd.f32 %v115, %v116
    %v118 = vrot.slane %v117, 2
    %v119 = vadd.f32 %v117, %v118
    %v120 = vrot.slane %v119, 1
    %v121 = vadd.f32 %v119, %v120
    %v122 = vsel %vm45, %v114, 0.0
    %v123 = vrot.slane %v122, 4
    %v124 = vadd.f32 %v122, %v123
    %v125 = vrot.slane %v124, 2
    %v126 = vadd.f32 %v124, %v125
    %v127 = vrot.slane %v126, 1
    %v128 = vadd.f32 %v126, %v127
    %v129 = vld [vmem:[#allocation5] sm:$0xff]
    %v130 = vld [vmem:[#allocation5 + $0x8] sm:$0xff]
    %v131 = vld [vmem:[#allocation5 + $0x10] sm:$0xff]
    %v132 = vld [vmem:[#allocation5 + $0x18] sm:$0xff]
    %v133 = vld [vmem:[%s2] sm:$0x1]
    %v135 = vlaneseq
    %v136 = vshrl.u32 %v135, 7
    %v137 = vsub.s32 0, %v136
    %v138 = vrot.slane %v133, %v137
    %vm142 = vcmask 1041409
    %v143 = vsel %vm142, %v128, %v121
    %v144 = vsel %vm45, %v143, 0
    %146 = vmatprep.subr.mxu0 0.0
    %v147 = vand.u32 %v129, 4294901760
    %148 = vmatpush1.msra.mxu0 %v147
    %149 = vmatprep.subr.mxu0 0.0
    %v150 = vand.u32 %v130, 4294901760
    %151 = vmatpush1.msra.mxu0 %v150
    %152 = vmatprep.subr.mxu0 0.0
    %v153 = vand.u32 %v131, 4294901760
    %154 = vmatpush1.msra.mxu0 %v153
    %155 = vmatprep.subr.mxu0 0.0
    %v156 = vand.u32 %v132, 4294901760
    %157 = vmatpush1.msra.mxu0 %v156
    %158 = vmatprep.subr.mxu0 0.0
    %159 = vmatpush1.msra.mxu0 0.0
    %160 = vmatprep.subr.mxu0 0.0
    %161 = vmatpush1.msra.mxu0 0.0
    %162 = vmatprep.subr.mxu0 0.0
    %163 = vmatpush1.msra.mxu0 0.0
    %164 = vmatprep.subr.mxu0 0.0
    %165 = vmatpush1.msra.mxu0 0.0
    %166 = vmatprep.subr.mxu0 0.0
    %167 = vmatpush1.msra.mxu0 0.0
    %168 = vmatprep.subr.mxu0 0.0
    %169 = vmatpush1.msra.mxu0 0.0
    %170 = vmatprep.subr.mxu0 0.0
    %171 = vmatpush1.msra.mxu0 0.0
    %172 = vmatprep.subr.mxu0 0.0
    %173 = vmatpush1.msra.mxu0 0.0
    %174 = vmatprep.subr.mxu0 0.0
    %175 = vmatpush1.msra.mxu0 0.0
    %176 = vmatprep.subr.mxu0 0.0
    %177 = vmatpush1.msra.mxu0 0.0
    %178 = vmatprep.subr.mxu0 0.0
    %179 = vmatpush1.msra.mxu0 0.0
    %180 = vmatprep.subr.mxu0 0.0
    %181 = vmatpush1.msra.mxu0 0.0
    %182 = vmatprep.subr.mxu0 0.0
    %183 = vmatpush1.msra.mxu0 0.0
    %184 = vmatprep.subr.mxu0 0.0
    %185 = vmatpush1.msra.mxu0 0.0
    %186 = vmatprep.subr.mxu0 0.0
    %187 = vmatpush1.msra.mxu0 0.0
    %188 = vmatprep.subr.mxu0 0.0
    %189 = vmatpush1.msra.mxu0 0.0
    %190 = vmatprep.subr.mxu0 0.0
    %191 = vmatpush1.msra.mxu0 0.0
    %192 = vmatprep.subr.mxu0 0.0
    %193 = vmatpush1.msra.mxu0 0.0
    %194 = vmatprep.subr.mxu0 0.0
    %195 = vmatpush1.msra.mxu0 0.0
    %196 = vmatprep.subr.mxu0 0.0
    %197 = vmatpush1.msra.mxu0 0.0
    %198 = vmatprep.subr.mxu0 0.0
    %199 = vmatpush1.msra.mxu0 0.0
    %200 = vmatprep.subr.mxu0 0.0
    %201 = vmatpush1.msra.mxu0 0.0
    %202 = vmatprep.subr.mxu0 0.0
    %203 = vmatpush1.msra.mxu0 0.0
    %204 = vmatprep.subr.mxu0 0.0
    %205 = vmatpush1.msra.mxu0 0.0
    %206 = vmatprep.subr.mxu0 0.0
    %207 = vmatpush1.msra.mxu0 0.0
    %208 = vmatprep.subr.mxu0 0.0
    %209 = vmatpush1.msra.mxu0 0.0
    %210 = vmatprep.subr.mxu0 0.0
    %211 = vmatpush1.msra.mxu0 0.0
    %212 = vmatprep.subr.mxu0 0.0
    %213 = vmatpush1.msra.mxu0 0.0
    %214 = vmatprep.mubr.f32.mxu0 0.0
    %v215 = vand.u32 %v144, 4294901760
    %v216 = vsub.f32 %v144, %v215
    %v217 = vand.u32 %v216, 4294901760
    %v218 = vsub.f32 %v216, %v217
    %v219 = vand.u32 %v218, 4294901760
    %220 = vmatmul.mubr.f32.gmra.mrb[0].mxu0 %v219
    %v221 = vpop.f32.mrb[0].mxu0
    %v222 = vadd.f32 %v138, %v221
    %v223 = vpop.f32.mrb[0].mxu0
    %224 = vdwg.mxu0
    %225 = vmatprep.subr.mxu0 0.0
    %v226 = vand.u32 %v129, 4294901760
    %v227 = vsub.f32 %v129, %v226
    %v228 = vand.u32 %v227, 4294901760
    %v229 = vsub.f32 %v227, %v228
    %v230 = vand.u32 %v229, 4294901760
    %231 = vmatpush1.msra.mxu0 %v230
    %232 = vmatprep.subr.mxu0 0.0
    %v233 = vand.u32 %v130, 4294901760
    %v234 = vsub.f32 %v130, %v233
    %v235 = vand.u32 %v234, 4294901760
    %v236 = vsub.f32 %v234, %v235
    %v237 = vand.u32 %v236, 4294901760
    %238 = vmatpush1.msra.mxu0 %v237
    %239 = vmatprep.subr.mxu0 0.0
    %v240 = vand.u32 %v131, 4294901760
    %v241 = vsub.f32 %v131, %v240
    %v242 = vand.u32 %v241, 4294901760
    %v243 = vsub.f32 %v241, %v242
    %v244 = vand.u32 %v243, 4294901760
    %245 = vmatpush1.msra.mxu0 %v244
    %246 = vmatprep.subr.mxu0 0.0
    %v247 = vand.u32 %v132, 4294901760
    %v248 = vsub.f32 %v132, %v247
    %v249 = vand.u32 %v248, 4294901760
    %v250 = vsub.f32 %v248, %v249
    %v251 = vand.u32 %v250, 4294901760
    %252 = vmatpush1.msra.mxu0 %v251
    %253 = vmatprep.subr.mxu0 0.0
    %254 = vmatpush1.msra.mxu0 0.0
    %255 = vmatprep.subr.mxu0 0.0
    %256 = vmatpush1.msra.mxu0 0.0
    %257 = vmatprep.subr.mxu0 0.0
    %258 = vmatpush1.msra.mxu0 0.0
    %259 = vmatprep.subr.mxu0 0.0
    %260 = vmatpush1.msra.mxu0 0.0
    %261 = vmatprep.subr.mxu0 0.0
    %262 = vmatpush1.msra.mxu0 0.0
    %263 = vmatprep.subr.mxu0 0.0
    %264 = vmatpush1.msra.mxu0 0.0
    %265 = vmatprep.subr.mxu0 0.0
    %266 = vmatpush1.msra.mxu0 0.0
    %267 = vmatprep.subr.mxu0 0.0
    %268 = vmatpush1.msra.mxu0 0.0
    %269 = vmatprep.subr.mxu0 0.0
    %270 = vmatpush1.msra.mxu0 0.0
    %271 = vmatprep.subr.mxu0 0.0
    %272 = vmatpush1.msra.mxu0 0.0
    %273 = vmatprep.subr.mxu0 0.0
    %274 = vmatpush1.msra.mxu0 0.0
    %275 = vmatprep.subr.mxu0 0.0
    %276 = vmatpush1.msra.mxu0 0.0
    %277 = vmatprep.subr.mxu0 0.0
    %278 = vmatpush1.msra.mxu0 0.0
    %279 = vmatprep.subr.mxu0 0.0
    %280 = vmatpush1.msra.mxu0 0.0
    %281 = vmatprep.subr.mxu0 0.0
    %282 = vmatpush1.msra.mxu0 0.0
    %283 = vmatprep.subr.mxu0 0.0
    %284 = vmatpush1.msra.mxu0 0.0
    %285 = vmatprep.subr.mxu0 0.0
    %286 = vmatpush1.msra.mxu0 0.0
    %287 = vmatprep.subr.mxu0 0.0
    %288 = vmatpush1.msra.mxu0 0.0
    %289 = vmatprep.subr.mxu0 0.0
    %290 = vmatpush1.msra.mxu0 0.0
    %291 = vmatprep.subr.mxu0 0.0
    %292 = vmatpush1.msra.mxu0 0.0
    %293 = vmatprep.subr.mxu0 0.0
    %294 = vmatpush1.msra.mxu0 0.0
    %295 = vmatprep.subr.mxu0 0.0
    %296 = vmatpush1.msra.mxu0 0.0
    %297 = vmatprep.subr.mxu0 0.0
    %298 = vmatpush1.msra.mxu0 0.0
    %299 = vmatprep.subr.mxu0 0.0
    %300 = vmatpush1.msra.mxu0 0.0
    %301 = vmatprep.subr.mxu0 0.0
    %302 = vmatpush1.msra.mxu0 0.0
    %303 = vmatprep.subr.mxu0 0.0
    %304 = vmatpush1.msra.mxu0 0.0
    %305 = vmatprep.subr.mxu0 0.0
    %306 = vmatpush1.msra.mxu0 0.0
    %307 = vmatprep.subr.mxu0 0.0
    %308 = vmatpush1.msra.mxu0 0.0
    %309 = vmatprep.mubr.f32.mxu0 0.0
    %v310 = vand.u32 %v144, 4294901760
    %311 = vmatmul.mubr.f32.gmra.mrb[0].mxu0 %v310
    %v312 = vpop.f32.mrb[0].mxu0
    %v313 = vadd.f32 %v222, %v312
    %v314 = vpop.f32.mrb[0].mxu0
    %315 = vdwg.mxu0
    %316 = vmatprep.subr.mxu0 0.0
    %v317 = vand.u32 %v129, 4294901760
    %v318 = vsub.f32 %v129, %v317
    %319 = vmatpush1.msra.mxu0 %v318
    %320 = vmatprep.subr.mxu0 0.0
    %v321 = vand.u32 %v130, 4294901760
    %v322 = vsub.f32 %v130, %v321
    %323 = vmatpush1.msra.mxu0 %v322
    %324 = vmatprep.subr.mxu0 0.0
    %v325 = vand.u32 %v131, 4294901760
    %v326 = vsub.f32 %v131, %v325
    %327 = vmatpush1.msra.mxu0 %v326
    %328 = vmatprep.subr.mxu0 0.0
    %v329 = vand.u32 %v132, 4294901760
    %v330 = vsub.f32 %v132, %v329
    %331 = vmatpush1.msra.mxu0 %v330
    %332 = vmatprep.subr.mxu0 0.0
    %333 = vmatpush1.msra.mxu0 0.0
    %334 = vmatprep.subr.mxu0 0.0
    %335 = vmatpush1.msra.mxu0 0.0
    %336 = vmatprep.subr.mxu0 0.0
    %337 = vmatpush1.msra.mxu0 0.0
    %338 = vmatprep.subr.mxu0 0.0
    %339 = vmatpush1.msra.mxu0 0.0
    %340 = vmatprep.subr.mxu0 0.0
    %341 = vmatpush1.msra.mxu0 0.0
    %342 = vmatprep.subr.mxu0 0.0
    %343 = vmatpush1.msra.mxu0 0.0
    %344 = vmatprep.subr.mxu0 0.0
    %345 = vmatpush1.msra.mxu0 0.0
    %346 = vmatprep.subr.mxu0 0.0
    %347 = vmatpush1.msra.mxu0 0.0
    %348 = vmatprep.subr.mxu0 0.0
    %349 = vmatpush1.msra.mxu0 0.0
    %350 = vmatprep.subr.mxu0 0.0
    %351 = vmatpush1.msra.mxu0 0.0
    %352 = vmatprep.subr.mxu0 0.0
    %353 = vmatpush1.msra.mxu0 0.0
    %354 = vmatprep.subr.mxu0 0.0
    %355 = vmatpush1.msra.mxu0 0.0
    %356 = vmatprep.subr.mxu0 0.0
    %357 = vmatpush1.msra.mxu0 0.0
    %358 = vmatprep.subr.mxu0 0.0
    %359 = vmatpush1.msra.mxu0 0.0
    %360 = vmatprep.subr.mxu0 0.0
    %361 = vmatpush1.msra.mxu0 0.0
    %362 = vmatprep.subr.mxu0 0.0
    %363 = vmatpush1.msra.mxu0 0.0
    %364 = vmatprep.subr.mxu0 0.0
    %365 = vmatpush1.msra.mxu0 0.0
    %366 = vmatprep.subr.mxu0 0.0
    %367 = vmatpush1.msra.mxu0 0.0
    %368 = vmatprep.subr.mxu0 0.0
    %369 = vmatpush1.msra.mxu0 0.0
    %370 = vmatprep.subr.mxu0 0.0
    %371 = vmatpush1.msra.mxu0 0.0
    %372 = vmatprep.subr.mxu0 0.0
    %373 = vmatpush1.msra.mxu0 0.0
    %374 = vmatprep.subr.mxu0 0.0
    %375 = vmatpush1.msra.mxu0 0.0
    %376 = vmatprep.subr.mxu0 0.0
    %377 = vmatpush1.msra.mxu0 0.0
    %378 = vmatprep.subr.mxu0 0.0
    %379 = vmatpush1.msra.mxu0 0.0
    %380 = vmatprep.subr.mxu0 0.0
    %381 = vmatpush1.msra.mxu0 0.0
    %382 = vmatprep.subr.mxu0 0.0
    %383 = vmatpush1.msra.mxu0 0.0
    %384 = vmatprep.subr.mxu0 0.0
    %385 = vmatpush1.msra.mxu0 0.0
    %386 = vmatprep.subr.mxu0 0.0
    %387 = vmatpush1.msra.mxu0 0.0
    %388 = vmatprep.mubr.f32.mxu0 0.0
    %v389 = vand.u32 %v144, 4294901760
    %v390 = vsub.f32 %v144, %v389
    %391 = vmatmul.mubr.f32.gmra.mrb[0].mxu0 %v390
    %v392 = vpop.f32.mrb[0].mxu0
    %v393 = vadd.f32 %v313, %v392
    %v394 = vpop.f32.mrb[0].mxu0
    %395 = vdwg.mxu0
    %396 = vmatprep.subr.mxu0 0.0
    %v397 = vand.u32 %v129, 4294901760
    %398 = vmatpush1.msra.mxu0 %v397
    %399 = vmatprep.subr.mxu0 0.0
    %v400 = vand.u32 %v130, 4294901760
    %401 = vmatpush1.msra.mxu0 %v400
    %402 = vmatprep.subr.mxu0 0.0
    %v403 = vand.u32 %v131, 4294901760
    %404 = vmatpush1.msra.mxu0 %v403
    %405 = vmatprep.subr.mxu0 0.0
    %v406 = vand.u32 %v132, 4294901760
    %407 = vmatpush1.msra.mxu0 %v406
    %408 = vmatprep.subr.mxu0 0.0
    %409 = vmatpush1.msra.mxu0 0.0
    %410 = vmatprep.subr.mxu0 0.0
    %411 = vmatpush1.msra.mxu0 0.0
    %412 = vmatprep.subr.mxu0 0.0
    %413 = vmatpush1.msra.mxu0 0.0
    %414 = vmatprep.subr.mxu0 0.0
    %415 = vmatpush1.msra.mxu0 0.0
    %416 = vmatprep.subr.mxu0 0.0
    %417 = vmatpush1.msra.mxu0 0.0
    %418 = vmatprep.subr.mxu0 0.0
    %419 = vmatpush1.msra.mxu0 0.0
    %420 = vmatprep.subr.mxu0 0.0
    %421 = vmatpush1.msra.mxu0 0.0
    %422 = vmatprep.subr.mxu0 0.0
    %423 = vmatpush1.msra.mxu0 0.0
    %424 = vmatprep.subr.mxu0 0.0
    %425 = vmatpush1.msra.mxu0 0.0
    %426 = vmatprep.subr.mxu0 0.0
    %427 = vmatpush1.msra.mxu0 0.0
    %428 = vmatprep.subr.mxu0 0.0
    %429 = vmatpush1.msra.mxu0 0.0
    %430 = vmatprep.subr.mxu0 0.0
    %431 = vmatpush1.msra.mxu0 0.0
    %432 = vmatprep.subr.mxu0 0.0
    %433 = vmatpush1.msra.mxu0 0.0
    %434 = vmatprep.subr.mxu0 0.0
    %435 = vmatpush1.msra.mxu0 0.0
    %436 = vmatprep.subr.mxu0 0.0
    %437 = vmatpush1.msra.mxu0 0.0
    %438 = vmatprep.subr.mxu0 0.0
    %439 = vmatpush1.msra.mxu0 0.0
    %440 = vmatprep.subr.mxu0 0.0
    %441 = vmatpush1.msra.mxu0 0.0
    %442 = vmatprep.subr.mxu0 0.0
    %443 = vmatpush1.msra.mxu0 0.0
    %444 = vmatprep.subr.mxu0 0.0
    %445 = vmatpush1.msra.mxu0 0.0
    %446 = vmatprep.subr.mxu0 0.0
    %447 = vmatpush1.msra.mxu0 0.0
    %448 = vmatprep.subr.mxu0 0.0
    %449 = vmatpush1.msra.mxu0 0.0
    %450 = vmatprep.subr.mxu0 0.0
    %451 = vmatpush1.msra.mxu0 0.0
    %452 = vmatprep.subr.mxu0 0.0
    %453 = vmatpush1.msra.mxu0 0.0
    %454 = vmatprep.subr.mxu0 0.0
    %455 = vmatpush1.msra.mxu0 0.0
    %456 = vmatprep.subr.mxu0 0.0
    %457 = vmatpush1.msra.mxu0 0.0
    %458 = vmatprep.subr.mxu0 0.0
    %459 = vmatpush1.msra.mxu0 0.0
    %460 = vmatprep.subr.mxu0 0.0
    %461 = vmatpush1.msra.mxu0 0.0
    %462 = vmatprep.subr.mxu0 0.0
    %463 = vmatpush1.msra.mxu0 0.0
    %464 = vmatprep.mubr.f32.mxu0 0.0
    %v465 = vand.u32 %v144, 4294901760
    %v466 = vsub.f32 %v144, %v465
    %v467 = vand.u32 %v466, 4294901760
    %468 = vmatmul.mubr.f32.gmra.mrb[0].mxu0 %v467
    %v469 = vpop.f32.mrb[0].mxu0
    %v470 = vadd.f32 %v393, %v469
    %v471 = vpop.f32.mrb[0].mxu0
    %472 = vdwg.mxu0
    %473 = vmatprep.subr.mxu0 0.0
    %v474 = vand.u32 %v129, 4294901760
    %v475 = vsub.f32 %v129, %v474
    %v476 = vand.u32 %v475, 4294901760
    %477 = vmatpush1.msra.mxu0 %v476
    %478 = vmatprep.subr.mxu0 0.0
    %v479 = vand.u32 %v130, 4294901760
    %v480 = vsub.f32 %v130, %v479
    %v481 = vand.u32 %v480, 4294901760
    %482 = vmatpush1.msra.mxu0 %v481
    %483 = vmatprep.subr.mxu0 0.0
    %v484 = vand.u32 %v131, 4294901760
    %v485 = vsub.f32 %v131, %v484
    %v486 = vand.u32 %v485, 4294901760
    %487 = vmatpush1.msra.mxu0 %v486
    %488 = vmatprep.subr.mxu0 0.0
    %v489 = vand.u32 %v132, 4294901760
    %v490 = vsub.f32 %v132, %v489
    %v491 = vand.u32 %v490, 4294901760
    %492 = vmatpush1.msra.mxu0 %v491
    %493 = vmatprep.subr.mxu0 0.0
    %494 = vmatpush1.msra.mxu0 0.0
    %495 = vmatprep.subr.mxu0 0.0
    %496 = vmatpush1.msra.mxu0 0.0
    %497 = vmatprep.subr.mxu0 0.0
    %498 = vmatpush1.msra.mxu0 0.0
    %499 = vmatprep.subr.mxu0 0.0
    %500 = vmatpush1.msra.mxu0 0.0
    %501 = vmatprep.subr.mxu0 0.0
    %502 = vmatpush1.msra.mxu0 0.0
    %503 = vmatprep.subr.mxu0 0.0
    %504 = vmatpush1.msra.mxu0 0.0
    %505 = vmatprep.subr.mxu0 0.0
    %506 = vmatpush1.msra.mxu0 0.0
    %507 = vmatprep.subr.mxu0 0.0
    %508 = vmatpush1.msra.mxu0 0.0
    %509 = vmatprep.subr.mxu0 0.0
    %510 = vmatpush1.msra.mxu0 0.0
    %511 = vmatprep.subr.mxu0 0.0
    %512 = vmatpush1.msra.mxu0 0.0
    %513 = vmatprep.subr.mxu0 0.0
    %514 = vmatpush1.msra.mxu0 0.0
    %515 = vmatprep.subr.mxu0 0.0
    %516 = vmatpush1.msra.mxu0 0.0
    %517 = vmatprep.subr.mxu0 0.0
    %518 = vmatpush1.msra.mxu0 0.0
    %519 = vmatprep.subr.mxu0 0.0
    %520 = vmatpush1.msra.mxu0 0.0
    %521 = vmatprep.subr.mxu0 0.0
    %522 = vmatpush1.msra.mxu0 0.0
    %523 = vmatprep.subr.mxu0 0.0
    %524 = vmatpush1.msra.mxu0 0.0
    %525 = vmatprep.subr.mxu0 0.0
    %526 = vmatpush1.msra.mxu0 0.0
    %527 = vmatprep.subr.mxu0 0.0
    %528 = vmatpush1.msra.mxu0 0.0
    %529 = vmatprep.subr.mxu0 0.0
    %530 = vmatpush1.msra.mxu0 0.0
    %531 = vmatprep.subr.mxu0 0.0
    %532 = vmatpush1.msra.mxu0 0.0
    %533 = vmatprep.subr.mxu0 0.0
    %534 = vmatpush1.msra.mxu0 0.0
    %535 = vmatprep.subr.mxu0 0.0
    %536 = vmatpush1.msra.mxu0 0.0
    %537 = vmatprep.subr.mxu0 0.0
    %538 = vmatpush1.msra.mxu0 0.0
    %539 = vmatprep.subr.mxu0 0.0
    %540 = vmatpush1.msra.mxu0 0.0
    %541 = vmatprep.subr.mxu0 0.0
    %542 = vmatpush1.msra.mxu0 0.0
    %543 = vmatprep.subr.mxu0 0.0
    %544 = vmatpush1.msra.mxu0 0.0
    %545 = vmatprep.subr.mxu0 0.0
    %546 = vmatpush1.msra.mxu0 0.0
    %547 = vmatprep.subr.mxu0 0.0
    %548 = vmatpush1.msra.mxu0 0.0
    %549 = vmatprep.mubr.f32.mxu0 0.0
    %v550 = vand.u32 %v144, 4294901760
    %551 = vmatmul.mubr.f32.gmra.mrb[0].mxu0 %v550
    %v552 = vpop.f32.mrb[0].mxu0
    %v553 = vadd.f32 %v470, %v552
    %v554 = vpop.f32.mrb[0].mxu0
    %555 = vdwg.mxu0
    %556 = vmatprep.subr.mxu0 0.0
    %v557 = vand.u32 %v129, 4294901760
    %558 = vmatpush1.msra.mxu0 %v557
    %559 = vmatprep.subr.mxu0 0.0
    %v560 = vand.u32 %v130, 4294901760
    %561 = vmatpush1.msra.mxu0 %v560
    %562 = vmatprep.subr.mxu0 0.0
    %v563 = vand.u32 %v131, 4294901760
    %564 = vmatpush1.msra.mxu0 %v563
    %565 = vmatprep.subr.mxu0 0.0
    %v566 = vand.u32 %v132, 4294901760
    %567 = vmatpush1.msra.mxu0 %v566
    %568 = vmatprep.subr.mxu0 0.0
    %569 = vmatpush1.msra.mxu0 0.0
    %570 = vmatprep.subr.mxu0 0.0
    %571 = vmatpush1.msra.mxu0 0.0
    %572 = vmatprep.subr.mxu0 0.0
    %573 = vmatpush1.msra.mxu0 0.0
    %574 = vmatprep.subr.mxu0 0.0
    %575 = vmatpush1.msra.mxu0 0.0
    %576 = vmatprep.subr.mxu0 0.0
    %577 = vmatpush1.msra.mxu0 0.0
    %578 = vmatprep.subr.mxu0 0.0
    %579 = vmatpush1.msra.mxu0 0.0
    %580 = vmatprep.subr.mxu0 0.0
    %581 = vmatpush1.msra.mxu0 0.0
    %582 = vmatprep.subr.mxu0 0.0
    %583 = vmatpush1.msra.mxu0 0.0
    %584 = vmatprep.subr.mxu0 0.0
    %585 = vmatpush1.msra.mxu0 0.0
    %586 = vmatprep.subr.mxu0 0.0
    %587 = vmatpush1.msra.mxu0 0.0
    %588 = vmatprep.subr.mxu0 0.0
    %589 = vmatpush1.msra.mxu0 0.0
    %590 = vmatprep.subr.mxu0 0.0
    %591 = vmatpush1.msra.mxu0 0.0
    %592 = vmatprep.subr.mxu0 0.0
    %593 = vmatpush1.msra.mxu0 0.0
    %594 = vmatprep.subr.mxu0 0.0
    %595 = vmatpush1.msra.mxu0 0.0
    %596 = vmatprep.subr.mxu0 0.0
    %597 = vmatpush1.msra.mxu0 0.0
    %598 = vmatprep.subr.mxu0 0.0
    %599 = vmatpush1.msra.mxu0 0.0
    %600 = vmatprep.subr.mxu0 0.0
    %601 = vmatpush1.msra.mxu0 0.0
    %602 = vmatprep.subr.mxu0 0.0
    %603 = vmatpush1.msra.mxu0 0.0
    %604 = vmatprep.subr.mxu0 0.0
    %605 = vmatpush1.msra.mxu0 0.0
    %606 = vmatprep.subr.mxu0 0.0
    %607 = vmatpush1.msra.mxu0 0.0
    %608 = vmatprep.subr.mxu0 0.0
    %609 = vmatpush1.msra.mxu0 0.0
    %610 = vmatprep.subr.mxu0 0.0
    %611 = vmatpush1.msra.mxu0 0.0
    %612 = vmatprep.subr.mxu0 0.0
    %613 = vmatpush1.msra.mxu0 0.0
    %614 = vmatprep.subr.mxu0 0.0
    %615 = vmatpush1.msra.mxu0 0.0
    %616 = vmatprep.subr.mxu0 0.0
    %617 = vmatpush1.msra.mxu0 0.0
    %618 = vmatprep.subr.mxu0 0.0
    %619 = vmatpush1.msra.mxu0 0.0
    %620 = vmatprep.subr.mxu0 0.0
    %621 = vmatpush1.msra.mxu0 0.0
    %622 = vmatprep.subr.mxu0 0.0
    %623 = vmatpush1.msra.mxu0 0.0
    %624 = vmatprep.mubr.f32.mxu0 0.0
    %v625 = vand.u32 %v144, 4294901760
    %626 = vmatmul.mubr.f32.gmra.mrb[0].mxu0 %v625
    %v627 = vpop.f32.mrb[0].mxu0
    %v628 = vadd.f32 %v553, %v627
    %v629 = vpop.f32.mrb[0].mxu0
    %630 = vdwg.mxu0
    %v633 = vunpack.c.l.s4 1966171168
    %v634 = vunpack.c.0.s8 %v633
    %v635 = vlaneseq
    %v636 = vshrl.u32 %v635, 7
    %v637 = vsub.s32 %v634, %v636
    %v638 = vrot.slane %v628, %v637
    %v639 = vcombine.high %v638, %v638
    %v641 = vunpack.c.l.s4 1966171168
    %v642 = vunpack.c.0.s8 %v641
    %v643 = vlaneseq
    %v644 = vshrl.u32 %v643, 7
    %v645 = vsub.s32 %v642, %v644
    %v646 = vrot.slane %v638, %v645
    %v648 = vunpack.c.l.s4 1966171168
    %v649 = vunpack.c.0.s8 %v648
    %v650 = vlaneseq
    %v651 = vshrl.u32 %v650, 7
    %v652 = vsub.s32 %v649, %v651
    %v653 = vrot.slane %v639, %v652
    %vm656 = vcmask 253952
    %657 = vst.msk [vmem:[#allocation7] sm:$0x1] %vm656, %v646
    %658 = vst.msk [vmem:[#allocation7 + $0x1] sm:$0x1] %vm656, %v653
    // Predicated region
    $region22: #{tpu_custom_call.1} parent=1 // pred_check
      _
    $region23: #{tpu_custom_call.1} parent=1 // pred_check_branch
      %660 = sbr.rel (0) target = $region25
    $region24: #{tpu_custom_call.1} parent=1 // pred_region
      %s662 = ssub.s32 32, 32
      %663 = vsyncadd [#allocation4], %s662
      %s664 = sshll.u32 [#allocation7], 4
      %s665 = int_to_ptr.vmem [resolvable:$true] %s664
      %670 = dma.vmem_to_hbm [thread:$0]  %s665, 32, %s3, [#allocation4], 16, 16, 1
    $region25: #{tpu_custom_call.1} parent=1 // pred_fallthru
      _
    // Predicated region
    $region26: #{tpu_custom_call.1} parent=1 // pred_check
      _
    $region27: #{tpu_custom_call.1} parent=1 // pred_check_branch
      %672 = sbr.rel (0) target = $region29
    $region28: #{tpu_custom_call.1} parent=1 // pred_region
      %673 = dma.done [#allocation4], 32
    $region29: #{tpu_custom_call.1} parent=1 // pred_fallthru
      _
    %674 = vsyncpa [#allocation3], 1
    %675 = vsyncpa [#allocation6], 1
    %676 = vsyncpa [#allocation4], 1

</llo_original>
